<compile_context>
chip_gen: v6e
topology: v6e:2x2x1
jax: 0.10.0
libtpu: 0.0.40
codegen_flags: <defaults>
</compile_context>

<pallas_src>
import functools
import math

import jax
import jax.numpy as jnp
from jax.experimental import pallas as pl
from jax.experimental.pallas import tpu as pltpu


def _fused_forward_kernel(
    xs_ref,       # (L, B*K*E)   im2col'd (emb + pos), transposed layout
    wbd_ref,      # (B*K*E, B*C) block-diagonal conv weight (one matmul for all batches)
    cbias_ref,    # (1, B*C)     conv bias tiled per batch along lanes
    wqkv_ref,     # (3T, L)      fused (linear -> attention -> q/k/v) weights, transposed
    bqkv_ref,     # (3T, 1)      fused q/k/v biases
    ppool_ref,    # (H, T)       head-pooling matrix (sums DH lanes per head)
    pexp_ref,     # (T, H)       head-expansion matrix (= ppool transposed)
    wout_ref,     # (1, T)       fused (out_proj -> feed_forward -> linear_out) weight
    bout_ref,     # (1, 1)       fused output bias
    out_ref,      # (1, B*C)     lane-dense output; reshaped to (B, C, 1) in the wrapper
    *,
    batch,
):
    B = batch
    T = ppool_ref.shape[1]
    N = out_ref.shape[1]
    C = N // B

    # Conv1d for all batch elements as a single MXU matmul (im2col + block-diag weight).
    conv_t = jnp.dot(xs_ref[...], wbd_ref[...],
                     preferred_element_type=jnp.float32) + cbias_ref[...]          # (L, N)

    # Fused linear -> attention -> q/k/v projection: one matmul, 3T output sublanes.
    qkv_t = jnp.dot(wqkv_ref[...], conv_t,
                    preferred_element_type=jnp.float32) + bqkv_ref[...]             # (3T, N)
    q_t = qkv_t[0:T]            # (T, N)  scale 1/sqrt(DH) already folded into Wq/bq
    k_t = qkv_t[T:2 * T]
    v_t = qkv_t[2 * T:3 * T]

    ppool = ppool_ref[...]
    pexp = pexp_ref[...]

    # Multi-head attention over the batch axis. Rolling k/v by r*C lanes aligns each
    # query batch with a distinct key batch; k and v use the same roll, so the result
    # is independent of the roll sign convention.
    s_list, v_list = [], []
    for r in range(B):
        if r == 0:
            k_r, v_r = k_t, v_t
        else:
            k_r = pltpu.roll(k_t, shift=r * C, axis=1)
            v_r = pltpu.roll(v_t, shift=r * C, axis=1)
        v_list.append(v_r)
        # per-head dot products via head-pooling matmul (no lane slices / concats)
        s_list.append(jnp.dot(ppool, q_t * k_r,
                              preferred_element_type=jnp.float32))                  # (H, N)

    # softmax over the key-batch axis (the r candidates), elementwise over (H, N)
    m = s_list[0]
    for r in range(1, B):
        m = jnp.maximum(m, s_list[r])
    e_list = [jnp.exp(s - m) for s in s_list]
    denom = e_list[0]
    for r in range(1, B):
        denom = denom + e_list[r]
    inv = pl.reciprocal(denom, approx=True)                                          # (H, N)

    ctx = None
    for r in range(B):
        p_r = e_list[r] * inv                                                        # (H, N)
        term = jnp.dot(pexp, p_r, preferred_element_type=jnp.float32) * v_list[r]    # (T, N)
        ctx = term if ctx is None else ctx + term

    # Fused out_proj -> feed_forward -> linear_out; single lane-dense store.
    out_ref[...] = jnp.dot(wout_ref[...], ctx,
                           preferred_element_type=jnp.float32) + bout_ref[...]       # (1, N)


def forward_pallas(tokens, params, *, num_heads):
    B, S = tokens.shape
    emb = params["embedding"][tokens]                         # (B, S, E)
    pos = params["pos_embedding"][:S]                         # (S, E)
    x = (emb + pos[None]).astype(jnp.float32)                 # (B, S, E)
    x_t = jnp.transpose(x, (0, 2, 1))                         # (B, E, S)

    conv_w = params["conv_w"]                                 # (K, C, E)
    K, C, E = conv_w.shape
    L = S - K + 1
    T = params["lin_w"].shape[1]
    H = num_heads
    DH = T // H
    scale = 1.0 / math.sqrt(DH)

    # --- im2col (layout plumbing): Xs[l, b*K*E + j*E + e] = x_t[b, e, l + j] ---
    win = jnp.stack([x_t[:, :, j:j + L] for j in range(K)], axis=1)   # (B, K, E, L)
    xs = jnp.transpose(win, (3, 0, 1, 2)).reshape(L, B * K * E)       # (L, B*K*E)

    # --- block-diagonal conv weight: one matmul covers every batch element ---
    w_flat_t = jnp.transpose(conv_w, (0, 2, 1)).reshape(K * E, C)     # rows j*E+e, cols c
    wbd = jnp.kron(jnp.eye(B, dtype=jnp.float32), w_flat_t)           # (B*K*E, B*C)
    cbias = jnp.tile(params["conv_b"].reshape(1, C), (1, B))          # (1, B*C)

    # --- fold the linear chains offline (mathematically exact) ---
    A = params["lin_w"] @ params["att_w"]                             # (L, T)
    bA = params["lin_b"] @ params["att_w"] + params["att_b"]          # (1, T)
    wq_f = (A @ params["wq"]) * scale
    bq_f = (bA @ params["wq"] + params["bq"]) * scale
    wk_f = A @ params["wk"]
    bk_f = bA @ params["wk"] + params["bk"]
    wv_f = A @ params["wv"]
    bv_f = bA @ params["wv"] + params["bv"]
    wqkv_t = jnp.concatenate([wq_f, wk_f, wv_f], axis=1).T            # (3T, L)
    bqkv = jnp.concatenate([bq_f, bk_f, bv_f], axis=1).T              # (3T, 1)

    wout_t = (params["wo"] @ params["ff_w"] @ params["lout_w"]).T     # (1, T)
    bout = (params["bo"] @ params["ff_w"] + params["ff_b"]) @ params["lout_w"] \
        + params["lout_b"]                                            # (1, 1)

    # --- head pooling / expansion constants ---
    head_ids = jnp.arange(T) // DH
    ppool = (head_ids[None, :] == jnp.arange(H)[:, None]).astype(jnp.float32)   # (H, T)
    pexp = ppool.T                                                              # (T, H)

    args = (xs, wbd, cbias, wqkv_t, bqkv, ppool, pexp, wout_t, bout)
    vmem = pl.BlockSpec(memory_space=pltpu.MemorySpace.VMEM)
    out_row = pl.pallas_call(
        functools.partial(_fused_forward_kernel, batch=B),
        out_shape=jax.ShapeDtypeStruct((1, B * C), jnp.float32),
        in_specs=[vmem] * len(args),
        out_specs=vmem,
    )(*args)
    return out_row.reshape(B, C)[:, :, None]                          # (B, C, 1)


def forward_reference(tokens, params, *, num_heads):
    """Pure-JAX reference mirroring the PyTorch forward (for correctness check)."""
    emb = params["embedding"][tokens]                                 # (B, S, E)
    S = tokens.shape[1]
    x = emb + params["pos_embedding"][:S][None]                       # (B, S, E)
    x = jnp.transpose(x, (0, 2, 1))                                   # (B, E, S)
    conv_w, conv_b = params["conv_w"], params["conv_b"]
    K, C, _ = conv_w.shape
    L = S - K + 1
    conv = jnp.zeros((x.shape[0], C, L), jnp.float32)
    for j in range(K):
        conv = conv + jnp.einsum("ce,bel->bcl", conv_w[j], x[:, :, j:j + L])
    conv = conv + conv_b[None]                                        # (B, C, L)
    y = conv @ params["lin_w"] + params["lin_b"]                      # (B, C, T)
    a = y @ params["att_w"] + params["att_b"]
    q = a @ params["wq"] + params["bq"]
    k = a @ params["wk"] + params["bk"]
    v = a @ params["wv"] + params["bv"]
    B_, C_, T = q.shape
    DH = T // num_heads
    qh = q.reshape(B_, C_, num_heads, DH)
    kh = k.reshape(B_, C_, num_heads, DH)
    vh = v.reshape(B_, C_, num_heads, DH)
    s = jnp.einsum("inhd,jnhd->nhij", qh, kh) / math.sqrt(DH)
    p = jax.nn.softmax(s, axis=-1)
    ctx = jnp.einsum("nhij,jnhd->inhd", p, vh).reshape(B_, C_, T)
    o = ctx @ params["wo"] + params["bo"]
    z = o @ params["ff_w"] + params["ff_b"]
    return z @ params["lout_w"] + params["lout_b"]                    # (B, C, 1)


def init_params(key, *, vocab_size, embedding_dim, hidden_dim, transformer_dim,
                kernel_sizes, max_seq_len):
    assert len(set(kernel_sizes)) == 1, "reference forward requires equal kernel sizes"
    K = kernel_sizes[0]
    n_convs = len(kernel_sizes)
    C = n_convs * hidden_dim
    L = sum(kernel_sizes)
    T = transformer_dim
    E = embedding_dim

    keys = iter(jax.random.split(key, 20))

    def unif(shape, fan_in):
        bound = 1.0 / math.sqrt(fan_in)
        return jax.random.uniform(next(keys), shape, jnp.float32, -bound, bound)

    return {
        "embedding": jax.random.normal(next(keys), (vocab_size, E), jnp.float32),
        "pos_embedding": jax.random.normal(next(keys), (max_seq_len, E), jnp.float32),
        # stacked Conv1d weights: conv_w[j, c, e] corresponds to torch weight[c, e, j]
        # with the per-conv output channels concatenated along c (== torch.cat dim=1).
        "conv_w": unif((K, C, E), E * K),
        "conv_b": unif((C, 1), E * K),
        # all Linear weights stored pre-transposed to (in_features, out_features)
        "lin_w": unif((L, T), L), "lin_b": unif((1, T), L),
        "att_w": unif((T, T), T), "att_b": unif((1, T), T),
        "wq": unif((T, T), T), "wk": unif((T, T), T), "wv": unif((T, T), T),
        "bq": unif((1, T), T), "bk": unif((1, T), T), "bv": unif((1, T), T),
        "wo": unif((T, T), T), "bo": unif((1, T), T),
        "ff_w": unif((T, T), T), "ff_b": unif((1, T), T),
        "lout_w": unif((T, 1), hidden_dim), "lout_b": unif((1, 1), hidden_dim),
    }


if __name__ == "__main__":
    vocab_size = 50
    embedding_dim = input_dim = 16          # Conv1d in_channels == embedding_dim
    hidden_dim = transformer_dim = 32       # linear_out = Linear(hidden_dim, 1)
    num_heads = 4
    kernel_sizes = [3, 3]                   # equal sizes; sum == 6
    seq_len = sum(kernel_sizes) + kernel_sizes[0] - 1   # 8 -> conv length == 6
    max_seq_len = seq_len
    batch = 2                               # B*C = 128 -> lane-dense kernel layout
    assert transformer_dim % num_heads == 0

    key = jax.random.PRNGKey(0)
    pkey, tkey = jax.random.split(key)
    params = init_params(
        pkey,
        vocab_size=vocab_size,
        embedding_dim=embedding_dim,
        hidden_dim=hidden_dim,
        transformer_dim=transformer_dim,
        kernel_sizes=kernel_sizes,
        max_seq_len=max_seq_len,
    )
    tokens = jax.random.randint(tkey, (batch, seq_len), 0, vocab_size, dtype=jnp.int32)

    out = jax.block_until_ready(forward_pallas(tokens, params, num_heads=num_heads))
    ref = jax.block_until_ready(forward_reference(tokens, params, num_heads=num_heads))

    expected_shape = (batch, len(kernel_sizes) * hidden_dim, 1)
    assert out.shape == expected_shape, (out.shape, expected_shape)
    assert jnp.allclose(out, ref, rtol=2e-2, atol=2e-2), float(jnp.max(jnp.abs(out - ref)))
    print("KERNEL_OK")
</pallas_src>

<mosaic_0001>
module attributes {stable_mosaic.version = 11 : i64} {
  func.func @_fused_forward_kernel(%arg0: memref<6x96xf32, #tpu.memory_space<vmem>>, %arg1: memref<96x128xf32, #tpu.memory_space<vmem>>, %arg2: memref<1x128xf32, #tpu.memory_space<vmem>>, %arg3: memref<96x6xf32, #tpu.memory_space<vmem>>, %arg4: memref<96x1xf32, #tpu.memory_space<vmem>>, %arg5: memref<4x32xf32, #tpu.memory_space<vmem>>, %arg6: memref<32x4xf32, #tpu.memory_space<vmem>>, %arg7: memref<1x32xf32, #tpu.memory_space<vmem>>, %arg8: memref<1x1xf32, #tpu.memory_space<vmem>>, %arg9: memref<1x128xf32, #tpu.memory_space<vmem>>) attributes {dimension_semantics = [], scalar_prefetch = 0 : i64, scratch_operands = 0 : i64, tpu.core_type = #tpu.core_type<tc>} {
    %c0 = arith.constant 0 : index
    %c0_0 = arith.constant 0 : index
    %0 = vector.load %arg0[%c0, %c0_0] : memref<6x96xf32, #tpu.memory_space<vmem>>, vector<6x96xf32>
    %c0_1 = arith.constant 0 : index
    %c0_2 = arith.constant 0 : index
    %1 = vector.load %arg1[%c0_1, %c0_2] : memref<96x128xf32, #tpu.memory_space<vmem>>, vector<96x128xf32>
    %cst = arith.constant dense<0.000000e+00> : vector<6x128xf32>
    %2 = tpu.matmul %0, %1, %cst {dimension_numbers = #tpu.dot_dimension_numbers<[1], [0], [0], [1], [0, 0, 1, 1], [], []>} : vector<6x96xf32>, vector<96x128xf32>, vector<6x128xf32> -> vector<6x128xf32>
    %c0_3 = arith.constant 0 : index
    %c0_4 = arith.constant 0 : index
    %3 = vector.load %arg2[%c0_3, %c0_4] : memref<1x128xf32, #tpu.memory_space<vmem>>, vector<1x128xf32>
    %4 = vector.broadcast %3 : vector<1x128xf32> to vector<6x128xf32>
    %5 = arith.addf %2, %4 : vector<6x128xf32>
    %c0_5 = arith.constant 0 : index
    %c0_6 = arith.constant 0 : index
    %6 = vector.load %arg3[%c0_5, %c0_6] : memref<96x6xf32, #tpu.memory_space<vmem>>, vector<96x6xf32>
    %cst_7 = arith.constant dense<0.000000e+00> : vector<96x128xf32>
    %7 = tpu.matmul %6, %5, %cst_7 {dimension_numbers = #tpu.dot_dimension_numbers<[1], [0], [0], [1], [0, 0, 1, 1], [], []>} : vector<96x6xf32>, vector<6x128xf32>, vector<96x128xf32> -> vector<96x128xf32>
    %c0_8 = arith.constant 0 : index
    %c0_9 = arith.constant 0 : index
    %8 = vector.load %arg4[%c0_8, %c0_9] : memref<96x1xf32, #tpu.memory_space<vmem>>, vector<96x1xf32>
    %9 = vector.broadcast %8 : vector<96x1xf32> to vector<96x128xf32>
    %10 = arith.addf %7, %9 : vector<96x128xf32>
    %11 = vector.extract_strided_slice %10 {offsets = [0, 0], sizes = [32, 128], strides = [1, 1]} : vector<96x128xf32> to vector<32x128xf32>
    %12 = vector.extract_strided_slice %10 {offsets = [32, 0], sizes = [32, 128], strides = [1, 1]} : vector<96x128xf32> to vector<32x128xf32>
    %13 = vector.extract_strided_slice %10 {offsets = [64, 0], sizes = [32, 128], strides = [1, 1]} : vector<96x128xf32> to vector<32x128xf32>
    %c0_10 = arith.constant 0 : index
    %c0_11 = arith.constant 0 : index
    %14 = vector.load %arg5[%c0_10, %c0_11] : memref<4x32xf32, #tpu.memory_space<vmem>>, vector<4x32xf32>
    %c0_12 = arith.constant 0 : index
    %c0_13 = arith.constant 0 : index
    %15 = vector.load %arg6[%c0_12, %c0_13] : memref<32x4xf32, #tpu.memory_space<vmem>>, vector<32x4xf32>
    %16 = arith.mulf %11, %12 : vector<32x128xf32>
    %cst_14 = arith.constant dense<0.000000e+00> : vector<4x128xf32>
    %17 = tpu.matmul %14, %16, %cst_14 {dimension_numbers = #tpu.dot_dimension_numbers<[1], [0], [0], [1], [0, 0, 1, 1], [], []>} : vector<4x32xf32>, vector<32x128xf32>, vector<4x128xf32> -> vector<4x128xf32>
    %c64_i32 = arith.constant 64 : i32
    %18 = tpu.dynamic_rotate %12 by %c64_i32 dim 1 : vector<32x128xf32>, i32 -> vector<32x128xf32>
    %c64_i32_15 = arith.constant 64 : i32
    %19 = tpu.dynamic_rotate %13 by %c64_i32_15 dim 1 : vector<32x128xf32>, i32 -> vector<32x128xf32>
    %20 = arith.mulf %11, %18 : vector<32x128xf32>
    %cst_16 = arith.constant dense<0.000000e+00> : vector<4x128xf32>
    %21 = tpu.matmul %14, %20, %cst_16 {dimension_numbers = #tpu.dot_dimension_numbers<[1], [0], [0], [1], [0, 0, 1, 1], [], []>} : vector<4x32xf32>, vector<32x128xf32>, vector<4x128xf32> -> vector<4x128xf32>
    %22 = arith.maximumf %17, %21 : vector<4x128xf32>
    %23 = arith.subf %17, %22 : vector<4x128xf32>
    %24 = math.exp %23 : vector<4x128xf32>
    %25 = arith.subf %21, %22 : vector<4x128xf32>
    %26 = math.exp %25 : vector<4x128xf32>
    %27 = arith.addf %24, %26 : vector<4x128xf32>
    %28 = tpu.reciprocal %27 {approx = true} : vector<4x128xf32> -> vector<4x128xf32>
    %29 = arith.mulf %24, %28 : vector<4x128xf32>
    %cst_17 = arith.constant dense<0.000000e+00> : vector<32x128xf32>
    %30 = tpu.matmul %15, %29, %cst_17 {dimension_numbers = #tpu.dot_dimension_numbers<[1], [0], [0], [1], [0, 0, 1, 1], [], []>} : vector<32x4xf32>, vector<4x128xf32>, vector<32x128xf32> -> vector<32x128xf32>
    %31 = arith.mulf %30, %13 : vector<32x128xf32>
    %32 = arith.mulf %26, %28 : vector<4x128xf32>
    %cst_18 = arith.constant dense<0.000000e+00> : vector<32x128xf32>
    %33 = tpu.matmul %15, %32, %cst_18 {dimension_numbers = #tpu.dot_dimension_numbers<[1], [0], [0], [1], [0, 0, 1, 1], [], []>} : vector<32x4xf32>, vector<4x128xf32>, vector<32x128xf32> -> vector<32x128xf32>
    %34 = arith.mulf %33, %19 : vector<32x128xf32>
    %35 = arith.addf %31, %34 : vector<32x128xf32>
    %c0_19 = arith.constant 0 : index
    %c0_20 = arith.constant 0 : index
    %36 = vector.load %arg7[%c0_19, %c0_20] : memref<1x32xf32, #tpu.memory_space<vmem>>, vector<1x32xf32>
    %cst_21 = arith.constant dense<0.000000e+00> : vector<1x128xf32>
    %37 = tpu.matmul %36, %35, %cst_21 {dimension_numbers = #tpu.dot_dimension_numbers<[1], [0], [0], [1], [0, 0, 1, 1], [], []>} : vector<1x32xf32>, vector<32x128xf32>, vector<1x128xf32> -> vector<1x128xf32>
    %c0_22 = arith.constant 0 : index
    %c0_23 = arith.constant 0 : index
    %38 = vector.load %arg8[%c0_22, %c0_23] : memref<1x1xf32, #tpu.memory_space<vmem>>, vector<1x1xf32>
    %39 = vector.broadcast %38 : vector<1x1xf32> to vector<1x128xf32>
    %40 = arith.addf %37, %39 : vector<1x128xf32>
    %c0_24 = arith.constant 0 : index
    %c0_25 = arith.constant 0 : index
    %41 = vector.load %arg9[%c0_24, %c0_25] : memref<1x128xf32, #tpu.memory_space<vmem>>, vector<1x128xf32>
    tpu.vector_store %arg9[%c0_24, %c0_25], %40 {strides = array<i32>} : memref<1x128xf32, #tpu.memory_space<vmem>>, vector<1x128xf32>,
    return
  }
}

</mosaic_0001>

<llo_original>
// kernel: tpu_custom_call.1
$region0: #{tpu_custom_call.1}
  #allocation0 [shape = 'u32[]', space=smem, size = 0x4, offset = 0x4, fixed_abs, tag = 'smem constant byte address 0x4 - core index']
  #allocation1 [shape = 'u32[144,128]{1,0:T(1,128)}', space=vmem, size = 0x12000, scoped, tag = 'internal scratch']
  #allocation2 [shape = 'f32[1,1]{1,0:T(1,128)S(1)}', space=vmem, size = 0x200, scoped, tag = 'scoped memory for tpu_custom_call.1']
  %s0 = inlined_call_operand.vmem [shape: f32[6,96], index: 0, kind: input, shape index: {}]
  %s1 = inlined_call_operand.vmem [shape: f32[96,128], index: 1, kind: input, shape index: {}]
  %s2 = inlined_call_operand.vmem [shape: f32[1,128], index: 2, kind: input, shape index: {}]
  %s3 = inlined_call_operand.vmem [shape: f32[96,6], index: 3, kind: input, shape index: {}]
  %s4 = inlined_call_operand.vmem [shape: f32[96,1], index: 4, kind: input, shape index: {}]
  %s5 = inlined_call_operand.vmem [shape: f32[4,32], index: 5, kind: input, shape index: {}]
  %s6 = inlined_call_operand.vmem [shape: f32[32,4], index: 6, kind: input, shape index: {}]
  %s7 = inlined_call_operand.vmem [shape: f32[1,32], index: 7, kind: input, shape index: {}]
  %s8 = inlined_call_operand.<no memory space> [shape: f32[1,1], index: 8, kind: input, shape index: {}]
  %s9 = inlined_call_operand.hbm [shape: f32[1,128], index: 9, kind: output, shape index: {}]
  %s10 = sld [smem:[#allocation0]]
  $region46: #{tpu_custom_call.1} parent=0
    _
  %s12 = ssub.s32 1, %s10
  %s13 = scalar_select 0, %s12, %s10
  %v14 = vstv %s8
  %15 = vst [vmem:[#allocation2] sm:$0x1] %v14
  $region1: #{tpu_custom_call.1} parent=0
    #allocation3 [shape = 'u8[512]{0}', space=vmem, size = 0x400, scoped, tag = 'output window, operand 0, single buffered']
    #allocation4 [shape = 's32[1]{0}', space=sflag, size = 0x4, scoped, tag = 'scoped memory for tpu_custom_call.1']
    %16 = vsyncpa [#allocation4], 0
    // Predicated region
    $region2: #{tpu_custom_call.1} parent=1 // pred_check
      _
    $region3: #{tpu_custom_call.1} parent=1 // pred_check_branch
      %18 = sbr.rel (0) target = $region5
    $region4: #{tpu_custom_call.1} parent=1 // pred_region
      _
    $region5: #{tpu_custom_call.1} parent=1 // pred_fallthru
      _
    // Predicated region
    $region6: #{tpu_custom_call.1} parent=1 // pred_check
      _
    $region7: #{tpu_custom_call.1} parent=1 // pred_check_branch
      %20 = sbr.rel (0) target = $region9
    $region8: #{tpu_custom_call.1} parent=1 // pred_region
      _
    $region9: #{tpu_custom_call.1} parent=1 // pred_fallthru
      _
    // Predicated region
    $region10: #{tpu_custom_call.1} parent=1 // pred_check
      _
    $region11: #{tpu_custom_call.1} parent=1 // pred_check_branch
      %22 = sbr.rel (0) target = $region13
    $region12: #{tpu_custom_call.1} parent=1 // pred_region
      _
    $region13: #{tpu_custom_call.1} parent=1 // pred_fallthru
      _
    // Predicated region
    $region14: #{tpu_custom_call.1} parent=1 // pred_check
      _
    $region15: #{tpu_custom_call.1} parent=1 // pred_check_branch
      %24 = sbr.rel (0) target = $region17
    $region16: #{tpu_custom_call.1} parent=1 // pred_region
      _
    $region17: #{tpu_custom_call.1} parent=1 // pred_fallthru
      _
    // Predicated region
    $region18: #{tpu_custom_call.1} parent=1 // pred_check
      _
    $region19: #{tpu_custom_call.1} parent=1 // pred_check_branch
      %26 = sbr.rel (0) target = $region21
    $region20: #{tpu_custom_call.1} parent=1 // pred_region
      _
    $region21: #{tpu_custom_call.1} parent=1 // pred_fallthru
      _
    // Predicated region
    $region22: #{tpu_custom_call.1} parent=1 // pred_check
      _
    $region23: #{tpu_custom_call.1} parent=1 // pred_check_branch
      %28 = sbr.rel (0) target = $region25
    $region24: #{tpu_custom_call.1} parent=1 // pred_region
      _
    $region25: #{tpu_custom_call.1} parent=1 // pred_fallthru
      _
    // Predicated region
    $region26: #{tpu_custom_call.1} parent=1 // pred_check
      _
    $region27: #{tpu_custom_call.1} parent=1 // pred_check_branch
      %30 = sbr.rel (0) target = $region29
    $region28: #{tpu_custom_call.1} parent=1 // pred_region
      _
    $region29: #{tpu_custom_call.1} parent=1 // pred_fallthru
      _
    // Predicated region
    $region30: #{tpu_custom_call.1} parent=1 // pred_check
      _
    $region31: #{tpu_custom_call.1} parent=1 // pred_check_branch
      %32 = sbr.rel (0) target = $region33
    $region32: #{tpu_custom_call.1} parent=1 // pred_region
      _
    $region33: #{tpu_custom_call.1} parent=1 // pred_fallthru
      _
    // Predicated region
    $region34: #{tpu_custom_call.1} parent=1 // pred_check
      _
    $region35: #{tpu_custom_call.1} parent=1 // pred_check_branch
      %34 = sbr.rel (0) target = $region37
    $region36: #{tpu_custom_call.1} parent=1 // pred_region
      _
    $region37: #{tpu_custom_call.1} parent=1 // pred_fallthru
      _
    %v35 = vld [vmem:[%s0] sm:$0x3f]
    %v36 = vld [vmem:[%s1] sm:$0xff]
    %v37 = vld [vmem:[%s1 + $0x8] sm:$0xff]
    %v38 = vld [vmem:[%s1 + $0x10] sm:$0xff]
    %v39 = vld [vmem:[%s1 + $0x18] sm:$0xff]
    %v40 = vld [vmem:[%s1 + $0x20] sm:$0xff]
    %v41 = vld [vmem:[%s1 + $0x28] sm:$0xff]
    %v42 = vld [vmem:[%s1 + $0x30] sm:$0xff]
    %v43 = vld [vmem:[%s1 + $0x38] sm:$0xff]
    %v44 = vld [vmem:[%s1 + $0x40] sm:$0xff]
    %v45 = vld [vmem:[%s1 + $0x48] sm:$0xff]
    %v46 = vld [vmem:[%s1 + $0x50] sm:$0xff]
    %v47 = vld [vmem:[%s1 + $0x58] sm:$0xff]
    %v48 = vld [vmem:[%s2] sm:$0x1]
    %v50 = vlaneseq
    %v51 = vshrl.u32 %v50, 7
    %v52 = vsub.s32 0, %v51
    %v53 = vrot.slane %v48, %v52
    %vm55 = vcmask 785408
    %v57 = vsel %vm55, %v35, 0
    %59 = vmatprep.subr.mxu0 0.0
    %60 = vmatpush1.msra.mxu0 0.0
    %61 = vmatprep.subr.mxu0 0.0
    %62 = vmatpush1.msra.mxu0 0.0
    %63 = vmatprep.subr.mxu0 0.0
    %64 = vmatpush1.msra.mxu0 0.0
    %65 = vmatprep.subr.mxu0 0.0
    %66 = vmatpush1.msra.mxu0 0.0
    %67 = vmatprep.subr.mxu0 0.0
    %68 = vmatpush1.msra.mxu0 %v47
    %69 = vmatprep.subr.mxu0 0.0
    %70 = vmatpush1.msra.mxu0 %v46
    %71 = vmatprep.subr.mxu0 0.0
    %72 = vmatpush1.msra.mxu0 %v45
    %73 = vmatprep.subr.mxu0 0.0
    %74 = vmatpush1.msra.mxu0 %v44
    %75 = vmatprep.subr.mxu0 0.0
    %76 = vmatpush1.msra.mxu0 %v43
    %77 = vmatprep.subr.mxu0 0.0
    %78 = vmatpush1.msra.mxu0 %v42
    %79 = vmatprep.subr.mxu0 0.0
    %80 = vmatpush1.msra.mxu0 %v41
    %81 = vmatprep.subr.mxu0 0.0
    %82 = vmatpush1.msra.mxu0 %v40
    %83 = vmatprep.subr.mxu0 0.0
    %84 = vmatpush1.msra.mxu0 %v39
    %85 = vmatprep.subr.mxu0 0.0
    %86 = vmatpush1.msra.mxu0 %v38
    %87 = vmatprep.subr.mxu0 0.0
    %88 = vmatpush1.msra.mxu0 %v37
    %89 = vmatprep.subr.mxu0 0.0
    %90 = vmatpush1.msra.mxu0 %v36
    %91 = vmatprep.subr.mxu0 0.0
    %92 = vmatpush2.msra.mxu0 0.0
    %93 = vmatprep.subr.mxu0 0.0
    %94 = vmatpush2.msra.mxu0 0.0
    %95 = vmatprep.subr.mxu0 0.0
    %96 = vmatpush2.msra.mxu0 0.0
    %97 = vmatprep.subr.mxu0 0.0
    %98 = vmatpush2.msra.mxu0 0.0
    %99 = vmatprep.subr.mxu0 0.0
    %100 = vmatpush2.msra.mxu0 0.0
    %101 = vmatprep.subr.mxu0 0.0
    %102 = vmatpush2.msra.mxu0 0.0
    %103 = vmatprep.subr.mxu0 0.0
    %104 = vmatpush2.msra.mxu0 0.0
    %105 = vmatprep.subr.mxu0 0.0
    %106 = vmatpush2.msra.mxu0 0.0
    %107 = vmatprep.subr.mxu0 0.0
    %108 = vmatpush2.msra.mxu0 0.0
    %109 = vmatprep.subr.mxu0 0.0
    %110 = vmatpush2.msra.mxu0 0.0
    %111 = vmatprep.subr.mxu0 0.0
    %112 = vmatpush2.msra.mxu0 0.0
    %113 = vmatprep.subr.mxu0 0.0
    %114 = vmatpush2.msra.mxu0 0.0
    %115 = vmatprep.subr.mxu0 0.0
    %116 = vmatpush2.msra.mxu0 0.0
    %117 = vmatprep.subr.mxu0 0.0
    %118 = vmatpush2.msra.mxu0 0.0
    %119 = vmatprep.subr.mxu0 0.0
    %120 = vmatpush2.msra.mxu0 0.0
    %121 = vmatprep.subr.mxu0 0.0
    %122 = vmatpush2.msra.mxu0 0.0
    %123 = vmatprep.mubr.f32.mxu0 0.0
    %124 = vmatmul.mubr.f32.gmra.mxu0 %v57
    %v125 = vpop.f32.mrf.mxu0
    %v126 = vadd.f32 %v53, %v125
    %v127 = vpop.f32.mrf.mxu0
    %128 = vdwg.mxu0
    %v129 = vld [vmem:[%s3] sm:$0xff]
    %v130 = vld [vmem:[%s3 + $0x8] sm:$0xff]
    %v131 = vld [vmem:[%s3 + $0x10] sm:$0xff]
    %v132 = vld [vmem:[%s3 + $0x18] sm:$0xff]
    %v133 = vld [vmem:[%s3 + $0x20] sm:$0xff]
    %v134 = vld [vmem:[%s3 + $0x28] sm:$0xff]
    %v135 = vld [vmem:[%s3 + $0x30] sm:$0xff]
    %v136 = vld [vmem:[%s3 + $0x38] sm:$0xff]
    %v137 = vld [vmem:[%s3 + $0x40] sm:$0xff]
    %v138 = vld [vmem:[%s3 + $0x48] sm:$0xff]
    %v139 = vld [vmem:[%s3 + $0x50] sm:$0xff]
    %v140 = vld [vmem:[%s3 + $0x58] sm:$0xff]
    %v141 = vld [vmem:[%s4] sm:$0xff]
    %v142 = vld [vmem:[%s4 + $0x8] sm:$0xff]
    %v143 = vld [vmem:[%s4 + $0x10] sm:$0xff]
    %v144 = vld [vmem:[%s4 + $0x18] sm:$0xff]
    %v145 = vld [vmem:[%s4 + $0x20] sm:$0xff]
    %v146 = vld [vmem:[%s4 + $0x28] sm:$0xff]
    %v147 = vld [vmem:[%s4 + $0x30] sm:$0xff]
    %v148 = vld [vmem:[%s4 + $0x38] sm:$0xff]
    %v149 = vld [vmem:[%s4 + $0x40] sm:$0xff]
    %v150 = vld [vmem:[%s4 + $0x48] sm:$0xff]
    %v151 = vld [vmem:[%s4 + $0x50] sm:$0xff]
    %v152 = vld [vmem:[%s4 + $0x58] sm:$0xff]
    %154 = vset.pattern.permute.xlu0 0
    %155 = vperm.xlu0 %154, %v141
    %v156 = vpop.permute.xlu0 %155
    %159 = vset.pattern.permute.xlu0 0
    %160 = vperm.xlu0 %159, %v142
    %v161 = vpop.permute.xlu0 %160
    %164 = vset.pattern.permute.xlu0 0
    %165 = vperm.xlu0 %164, %v143
    %v166 = vpop.permute.xlu0 %165
    %169 = vset.pattern.permute.xlu0 0
    %170 = vperm.xlu0 %169, %v144
    %v171 = vpop.permute.xlu0 %170
    %174 = vset.pattern.permute.xlu0 0
    %175 = vperm.xlu0 %174, %v145
    %v176 = vpop.permute.xlu0 %175
    %179 = vset.pattern.permute.xlu0 0
    %180 = vperm.xlu0 %179, %v146
    %v181 = vpop.permute.xlu0 %180
    %184 = vset.pattern.permute.xlu0 0
    %185 = vperm.xlu0 %184, %v147
    %v186 = vpop.permute.xlu0 %185
    %189 = vset.pattern.permute.xlu0 0
    %190 = vperm.xlu0 %189, %v148
    %v191 = vpop.permute.xlu0 %190
    %194 = vset.pattern.permute.xlu0 0
    %195 = vperm.xlu0 %194, %v149
    %v196 = vpop.permute.xlu0 %195
    %199 = vset.pattern.permute.xlu0 0
    %200 = vperm.xlu0 %199, %v150
    %v201 = vpop.permute.xlu0 %200
    %204 = vset.pattern.permute.xlu0 0
    %205 = vperm.xlu0 %204, %v151
    %v206 = vpop.permute.xlu0 %205
    %209 = vset.pattern.permute.xlu0 0
    %210 = vperm.xlu0 %209, %v152
    %v211 = vpop.permute.xlu0 %210
    %vm213 = vcmask 48128
    %v215 = vsel %vm213, %v129, 0
    %v218 = vsel %vm213, %v130, 0
    %v221 = vsel %vm213, %v131, 0
    %v224 = vsel %vm213, %v132, 0
    %v227 = vsel %vm213, %v133, 0
    %v230 = vsel %vm213, %v134, 0
    %v233 = vsel %vm213, %v135, 0
    %v236 = vsel %vm213, %v136, 0
    %v239 = vsel %vm213, %v137, 0
    %v242 = vsel %vm213, %v138, 0
    %v245 = vsel %vm213, %v139, 0
    %v248 = vsel %vm213, %v140, 0
    %vm250 = vcmask 1045504
    %v252 = vsel %vm250, %v126, 0
    %254 = vmatprep.subr.mxu0 0.0
    %255 = vmatpush1.msra.mxu0 0.0
    %256 = vmatprep.subr.mxu0 0.0
    %257 = vmatpush1.msra.mxu0 0.0
    %258 = vmatprep.subr.mxu0 0.0
    %259 = vmatpush1.msra.mxu0 0.0
    %260 = vmatprep.subr.mxu0 0.0
    %261 = vmatpush1.msra.mxu0 0.0
    %262 = vmatprep.subr.mxu0 0.0
    %263 = vmatpush1.msra.mxu0 0.0
    %264 = vmatprep.subr.mxu0 0.0
    %265 = vmatpush1.msra.mxu0 0.0
    %266 = vmatprep.subr.mxu0 0.0
    %267 = vmatpush1.msra.mxu0 0.0
    %268 = vmatprep.subr.mxu0 0.0
    %269 = vmatpush1.msra.mxu0 0.0
    %270 = vmatprep.subr.mxu0 0.0
    %271 = vmatpush1.msra.mxu0 0.0
    %272 = vmatprep.subr.mxu0 0.0
    %273 = vmatpush1.msra.mxu0 0.0
    %274 = vmatprep.subr.mxu0 0.0
    %275 = vmatpush1.msra.mxu0 0.0
    %276 = vmatprep.subr.mxu0 0.0
    %277 = vmatpush1.msra.mxu0 0.0
    %278 = vmatprep.subr.mxu0 0.0
    %279 = vmatpush1.msra.mxu0 0.0
    %280 = vmatprep.subr.mxu0 0.0
    %281 = vmatpush1.msra.mxu0 0.0
    %282 = vmatprep.subr.mxu0 0.0
    %283 = vmatpush1.msra.mxu0 0.0
    %284 = vmatprep.subr.mxu0 0.0
    %285 = vmatpush1.msra.mxu0 %v252
    %286 = vmatprep.subr.mxu0 0.0
    %287 = vmatpush2.msra.mxu0 0.0
    %288 = vmatprep.subr.mxu0 0.0
    %289 = vmatpush2.msra.mxu0 0.0
    %290 = vmatprep.subr.mxu0 0.0
    %291 = vmatpush2.msra.mxu0 0.0
    %292 = vmatprep.subr.mxu0 0.0
    %293 = vmatpush2.msra.mxu0 0.0
    %294 = vmatprep.subr.mxu0 0.0
    %295 = vmatpush2.msra.mxu0 0.0
    %296 = vmatprep.subr.mxu0 0.0
    %297 = vmatpush2.msra.mxu0 0.0
    %298 = vmatprep.subr.mxu0 0.0
    %299 = vmatpush2.msra.mxu0 0.0
    %300 = vmatprep.subr.mxu0 0.0
    %301 = vmatpush2.msra.mxu0 0.0
    %302 = vmatprep.subr.mxu0 0.0
    %303 = vmatpush2.msra.mxu0 0.0
    %304 = vmatprep.subr.mxu0 0.0
    %305 = vmatpush2.msra.mxu0 0.0
    %306 = vmatprep.subr.mxu0 0.0
    %307 = vmatpush2.msra.mxu0 0.0
    %308 = vmatprep.subr.mxu0 0.0
    %309 = vmatpush2.msra.mxu0 0.0
    %310 = vmatprep.subr.mxu0 0.0
    %311 = vmatpush2.msra.mxu0 0.0
    %312 = vmatprep.subr.mxu0 0.0
    %313 = vmatpush2.msra.mxu0 0.0
    %314 = vmatprep.subr.mxu0 0.0
    %315 = vmatpush2.msra.mxu0 0.0
    %316 = vmatprep.subr.mxu0 0.0
    %317 = vmatpush2.msra.mxu0 0.0
    %318 = vmatprep.mubr.f32.mxu0 0.0
    %319 = vmatmul.mubr.f32.gmra.mxu0 %v215
    %v320 = vpop.f32.mrf.mxu0
    %v321 = vadd.f32 %v156, %v320
    %v322 = vpop.f32.mrf.mxu0
    %323 = vmatprep.mubr.f32.mxu0 0.0
    %324 = vmatmul.mubr.f32.gmra.mxu0 %v218
    %v325 = vpop.f32.mrf.mxu0
    %v326 = vadd.f32 %v161, %v325
    %v327 = vpop.f32.mrf.mxu0
    %328 = vmatprep.mubr.f32.mxu0 0.0
    %329 = vmatmul.mubr.f32.gmra.mxu0 %v221
    %v330 = vpop.f32.mrf.mxu0
    %v331 = vadd.f32 %v166, %v330
    %v332 = vpop.f32.mrf.mxu0
    %333 = vmatprep.mubr.f32.mxu0 0.0
    %334 = vmatmul.mubr.f32.gmra.mxu0 %v224
    %v335 = vpop.f32.mrf.mxu0
    %v336 = vadd.f32 %v171, %v335
    %v337 = vpop.f32.mrf.mxu0
    %338 = vmatprep.mubr.f32.mxu0 0.0
    %339 = vmatmul.mubr.f32.gmra.mxu0 %v227
    %v340 = vpop.f32.mrf.mxu0
    %v341 = vadd.f32 %v176, %v340
    %v342 = vpop.f32.mrf.mxu0
    %343 = vmatprep.mubr.f32.mxu0 0.0
    %344 = vmatmul.mubr.f32.gmra.mxu0 %v230
    %v345 = vpop.f32.mrf.mxu0
    %v346 = vadd.f32 %v181, %v345
    %v347 = vpop.f32.mrf.mxu0
    %348 = vmatprep.mubr.f32.mxu0 0.0
    %349 = vmatmul.mubr.f32.gmra.mxu0 %v233
    %v350 = vpop.f32.mrf.mxu0
    %v351 = vadd.f32 %v186, %v350
    %v352 = vpop.f32.mrf.mxu0
    %353 = vmatprep.mubr.f32.mxu0 0.0
    %354 = vmatmul.mubr.f32.gmra.mxu0 %v236
    %v355 = vpop.f32.mrf.mxu0
    %v356 = vadd.f32 %v191, %v355
    %v357 = vpop.f32.mrf.mxu0
    %358 = vmatprep.mubr.f32.mxu0 0.0
    %359 = vmatmul.mubr.f32.gmra.mxu0 %v239
    %v360 = vpop.f32.mrf.mxu0
    %v361 = vadd.f32 %v196, %v360
    %v362 = vpop.f32.mrf.mxu0
    %363 = vmatprep.mubr.f32.mxu0 0.0
    %364 = vmatmul.mubr.f32.gmra.mxu0 %v242
    %v365 = vpop.f32.mrf.mxu0
    %v366 = vadd.f32 %v201, %v365
    %v367 = vpop.f32.mrf.mxu0
    %368 = vmatprep.mubr.f32.mxu0 0.0
    %369 = vmatmul.mubr.f32.gmra.mxu0 %v245
    %v370 = vpop.f32.mrf.mxu0
    %v371 = vadd.f32 %v206, %v370
    %v372 = vpop.f32.mrf.mxu0
    %373 = vmatprep.mubr.f32.mxu0 0.0
    %374 = vmatmul.mubr.f32.gmra.mxu0 %v248
    %v375 = vpop.f32.mrf.mxu0
    %v376 = vadd.f32 %v211, %v375
    %v377 = vpop.f32.mrf.mxu0
    %378 = vdwg.mxu0
    %v379 = vld [vmem:[%s5] sm:$0xf]
    %v380 = vld [vmem:[%s6] sm:$0xff]
    %v381 = vld [vmem:[%s6 + $0x8] sm:$0xff]
    %v382 = vld [vmem:[%s6 + $0x10] sm:$0xff]
    %v383 = vld [vmem:[%s6 + $0x18] sm:$0xff]
    %v384 = vmul.f32 %v321, %v341
    %v385 = vmul.f32 %v326, %v346
    %v386 = vmul.f32 %v331, %v351
    %v387 = vmul.f32 %v336, %v356
    %vm388 = vcmask 261120
    %v390 = vsel %vm388, %v379, 0
    %392 = vmatprep.subr.mxu0 0.0
    %393 = vmatpush1.msra.mxu0 0.0
    %394 = vmatprep.subr.mxu0 0.0
    %395 = vmatpush1.msra.mxu0 0.0
    %396 = vmatprep.subr.mxu0 0.0
    %397 = vmatpush1.msra.mxu0 0.0
    %398 = vmatprep.subr.mxu0 0.0
    %399 = vmatpush1.msra.mxu0 0.0
    %400 = vmatprep.subr.mxu0 0.0
    %401 = vmatpush1.msra.mxu0 0.0
    %402 = vmatprep.subr.mxu0 0.0
    %403 = vmatpush1.msra.mxu0 0.0
    %404 = vmatprep.subr.mxu0 0.0
    %405 = vmatpush1.msra.mxu0 0.0
    %406 = vmatprep.subr.mxu0 0.0
    %407 = vmatpush1.msra.mxu0 0.0
    %408 = vmatprep.subr.mxu0 0.0
    %409 = vmatpush1.msra.mxu0 0.0
    %410 = vmatprep.subr.mxu0 0.0
    %411 = vmatpush1.msra.mxu0 0.0
    %412 = vmatprep.subr.mxu0 0.0
    %413 = vmatpush1.msra.mxu0 0.0
    %414 = vmatprep.subr.mxu0 0.0
    %415 = vmatpush1.msra.mxu0 0.0
    %416 = vmatprep.subr.mxu0 0.0
    %417 = vmatpush1.msra.mxu0 %v387
    %418 = vmatprep.subr.mxu0 0.0
    %419 = vmatpush1.msra.mxu0 %v386
    %420 = vmatprep.subr.mxu0 0.0
    %421 = vmatpush1.msra.mxu0 %v385
    %422 = vmatprep.subr.mxu0 0.0
    %423 = vmatpush1.msra.mxu0 %v384
    %424 = vmatprep.subr.mxu0 0.0
    %425 = vmatpush2.msra.mxu0 0.0
    %426 = vmatprep.subr.mxu0 0.0
    %427 = vmatpush2.msra.mxu0 0.0
    %428 = vmatprep.subr.mxu0 0.0
    %429 = vmatpush2.msra.mxu0 0.0
    %430 = vmatprep.subr.mxu0 0.0
    %431 = vmatpush2.msra.mxu0 0.0
    %432 = vmatprep.subr.mxu0 0.0
    %433 = vmatpush2.msra.mxu0 0.0
    %434 = vmatprep.subr.mxu0 0.0
    %435 = vmatpush2.msra.mxu0 0.0
    %436 = vmatprep.subr.mxu0 0.0
    %437 = vmatpush2.msra.mxu0 0.0
    %438 = vmatprep.subr.mxu0 0.0
    %439 = vmatpush2.msra.mxu0 0.0
    %440 = vmatprep.subr.mxu0 0.0
    %441 = vmatpush2.msra.mxu0 0.0
    %442 = vmatprep.subr.mxu0 0.0
    %443 = vmatpush2.msra.mxu0 0.0
    %444 = vmatprep.subr.mxu0 0.0
    %445 = vmatpush2.msra.mxu0 0.0
    %446 = vmatprep.subr.mxu0 0.0
    %447 = vmatpush2.msra.mxu0 0.0
    %448 = vmatprep.subr.mxu0 0.0
    %449 = vmatpush2.msra.mxu0 0.0
    %450 = vmatprep.subr.mxu0 0.0
    %451 = vmatpush2.msra.mxu0 0.0
    %452 = vmatprep.subr.mxu0 0.0
    %453 = vmatpush2.msra.mxu0 0.0
    %454 = vmatprep.subr.mxu0 0.0
    %455 = vmatpush2.msra.mxu0 0.0
    %456 = vmatprep.mubr.f32.mxu0 0.0
    %457 = vmatmul.mubr.f32.gmra.mxu0 %v390
    %v458 = vpop.f32.mrf.mxu0
    %v459 = vadd.f32 0.0, %v458
    %v460 = vpop.f32.mrf.mxu0
    %461 = vdwg.mxu0
    %462 = vrot.lane.b32.xlu0 %v341, 64
    %v463 = vpop.permute.xlu0 %462
    %464 = vrot.lane.b32.xlu0 %v346, 64
    %v465 = vpop.permute.xlu0 %464
    %466 = vrot.lane.b32.xlu0 %v351, 64
    %v467 = vpop.permute.xlu0 %466
    %468 = vrot.lane.b32.xlu0 %v356, 64
    %v469 = vpop.permute.xlu0 %468
    %470 = vrot.lane.b32.xlu0 %v361, 64
    %v471 = vpop.permute.xlu0 %470
    %472 = vrot.lane.b32.xlu0 %v366, 64
    %v473 = vpop.permute.xlu0 %472
    %474 = vrot.lane.b32.xlu0 %v371, 64
    %v475 = vpop.permute.xlu0 %474
    %476 = vrot.lane.b32.xlu0 %v376, 64
    %v477 = vpop.permute.xlu0 %476
    %v478 = vmul.f32 %v321, %v463
    %v479 = vmul.f32 %v326, %v465
    %v480 = vmul.f32 %v331, %v467
    %v481 = vmul.f32 %v336, %v469
    %482 = vmatprep.subr.mxu0 0.0
    %483 = vmatpush1.msra.mxu0 0.0
    %484 = vmatprep.subr.mxu0 0.0
    %485 = vmatpush1.msra.mxu0 0.0
    %486 = vmatprep.subr.mxu0 0.0
    %487 = vmatpush1.msra.mxu0 0.0
    %488 = vmatprep.subr.mxu0 0.0
    %489 = vmatpush1.msra.mxu0 0.0
    %490 = vmatprep.subr.mxu0 0.0
    %491 = vmatpush1.msra.mxu0 0.0
    %492 = vmatprep.subr.mxu0 0.0
    %493 = vmatpush1.msra.mxu0 0.0
    %494 = vmatprep.subr.mxu0 0.0
    %495 = vmatpush1.msra.mxu0 0.0
    %496 = vmatprep.subr.mxu0 0.0
    %497 = vmatpush1.msra.mxu0 0.0
    %498 = vmatprep.subr.mxu0 0.0
    %499 = vmatpush1.msra.mxu0 0.0
    %500 = vmatprep.subr.mxu0 0.0
    %501 = vmatpush1.msra.mxu0 0.0
    %502 = vmatprep.subr.mxu0 0.0
    %503 = vmatpush1.msra.mxu0 0.0
    %504 = vmatprep.subr.mxu0 0.0
    %505 = vmatpush1.msra.mxu0 0.0
    %506 = vmatprep.subr.mxu0 0.0
    %507 = vmatpush1.msra.mxu0 %v481
    %508 = vmatprep.subr.mxu0 0.0
    %509 = vmatpush1.msra.mxu0 %v480
    %510 = vmatprep.subr.mxu0 0.0
    %511 = vmatpush1.msra.mxu0 %v479
    %512 = vmatprep.subr.mxu0 0.0
    %513 = vmatpush1.msra.mxu0 %v478
    %514 = vmatprep.subr.mxu0 0.0
    %515 = vmatpush2.msra.mxu0 0.0
    %516 = vmatprep.subr.mxu0 0.0
    %517 = vmatpush2.msra.mxu0 0.0
    %518 = vmatprep.subr.mxu0 0.0
    %519 = vmatpush2.msra.mxu0 0.0
    %520 = vmatprep.subr.mxu0 0.0
    %521 = vmatpush2.msra.mxu0 0.0
    %522 = vmatprep.subr.mxu0 0.0
    %523 = vmatpush2.msra.mxu0 0.0
    %524 = vmatprep.subr.mxu0 0.0
    %525 = vmatpush2.msra.mxu0 0.0
    %526 = vmatprep.subr.mxu0 0.0
    %527 = vmatpush2.msra.mxu0 0.0
    %528 = vmatprep.subr.mxu0 0.0
    %529 = vmatpush2.msra.mxu0 0.0
    %530 = vmatprep.subr.mxu0 0.0
    %531 = vmatpush2.msra.mxu0 0.0
    %532 = vmatprep.subr.mxu0 0.0
    %533 = vmatpush2.msra.mxu0 0.0
    %534 = vmatprep.subr.mxu0 0.0
    %535 = vmatpush2.msra.mxu0 0.0
    %536 = vmatprep.subr.mxu0 0.0
    %537 = vmatpush2.msra.mxu0 0.0
    %538 = vmatprep.subr.mxu0 0.0
    %539 = vmatpush2.msra.mxu0 0.0
    %540 = vmatprep.subr.mxu0 0.0
    %541 = vmatpush2.msra.mxu0 0.0
    %542 = vmatprep.subr.mxu0 0.0
    %543 = vmatpush2.msra.mxu0 0.0
    %544 = vmatprep.subr.mxu0 0.0
    %545 = vmatpush2.msra.mxu0 0.0
    %546 = vmatprep.mubr.f32.mxu0 0.0
    %547 = vmatmul.mubr.f32.gmra.mxu0 %v390
    %v548 = vpop.f32.mrf.mxu0
    %v549 = vadd.f32 0.0, %v548
    %v550 = vpop.f32.mrf.mxu0
    %551 = vdwg.mxu0
    %v552 = vmax.f32 %v459, %v549
    %v553 = vsub.f32 %v459, %v552
    %v554 = vmul.f32 %v553, 1.442695
    %v555 = vpow.pop %v554
    %v556 = vsub.f32 %v549, %v552
    %v557 = vmul.f32 %v556, 1.442695
    %v558 = vpow.pop %v557
    %v559 = vadd.f32 %v555, %v558
    %v560 = vrcp.pop %v559
    %v561 = vmul.f32 %v555, %v560
    %vm562 = vcmask 31744
    %v564 = vsel %vm562, %v380, 0
    %v567 = vsel %vm562, %v381, 0
    %v570 = vsel %vm562, %v382, 0
    %v573 = vsel %vm562, %v383, 0
    %vm575 = vcmask 1043456
    %v577 = vsel %vm575, %v561, 0
    %579 = vmatprep.subr.mxu0 0.0
    %580 = vmatpush1.msra.mxu0 0.0
    %581 = vmatprep.subr.mxu0 0.0
    %582 = vmatpush1.msra.mxu0 0.0
    %583 = vmatprep.subr.mxu0 0.0
    %584 = vmatpush1.msra.mxu0 0.0
    %585 = vmatprep.subr.mxu0 0.0
    %586 = vmatpush1.msra.mxu0 0.0
    %587 = vmatprep.subr.mxu0 0.0
    %588 = vmatpush1.msra.mxu0 0.0
    %589 = vmatprep.subr.mxu0 0.0
    %590 = vmatpush1.msra.mxu0 0.0
    %591 = vmatprep.subr.mxu0 0.0
    %592 = vmatpush1.msra.mxu0 0.0
    %593 = vmatprep.subr.mxu0 0.0
    %594 = vmatpush1.msra.mxu0 0.0
    %595 = vmatprep.subr.mxu0 0.0
    %596 = vmatpush1.msra.mxu0 0.0
    %597 = vmatprep.subr.mxu0 0.0
    %598 = vmatpush1.msra.mxu0 0.0
    %599 = vmatprep.subr.mxu0 0.0
    %600 = vmatpush1.msra.mxu0 0.0
    %601 = vmatprep.subr.mxu0 0.0
    %602 = vmatpush1.msra.mxu0 0.0
    %603 = vmatprep.subr.mxu0 0.0
    %604 = vmatpush1.msra.mxu0 0.0
    %605 = vmatprep.subr.mxu0 0.0
    %606 = vmatpush1.msra.mxu0 0.0
    %607 = vmatprep.subr.mxu0 0.0
    %608 = vmatpush1.msra.mxu0 0.0
    %609 = vmatprep.subr.mxu0 0.0
    %610 = vmatpush1.msra.mxu0 %v577
    %611 = vmatprep.subr.mxu0 0.0
    %612 = vmatpush2.msra.mxu0 0.0
    %613 = vmatprep.subr.mxu0 0.0
    %614 = vmatpush2.msra.mxu0 0.0
    %615 = vmatprep.subr.mxu0 0.0
    %616 = vmatpush2.msra.mxu0 0.0
    %617 = vmatprep.subr.mxu0 0.0
    %618 = vmatpush2.msra.mxu0 0.0
    %619 = vmatprep.subr.mxu0 0.0
    %620 = vmatpush2.msra.mxu0 0.0
    %621 = vmatprep.subr.mxu0 0.0
    %622 = vmatpush2.msra.mxu0 0.0
    %623 = vmatprep.subr.mxu0 0.0
    %624 = vmatpush2.msra.mxu0 0.0
    %625 = vmatprep.subr.mxu0 0.0
    %626 = vmatpush2.msra.mxu0 0.0
    %627 = vmatprep.subr.mxu0 0.0
    %628 = vmatpush2.msra.mxu0 0.0
    %629 = vmatprep.subr.mxu0 0.0
    %630 = vmatpush2.msra.mxu0 0.0
    %631 = vmatprep.subr.mxu0 0.0
    %632 = vmatpush2.msra.mxu0 0.0
    %633 = vmatprep.subr.mxu0 0.0
    %634 = vmatpush2.msra.mxu0 0.0
    %635 = vmatprep.subr.mxu0 0.0
    %636 = vmatpush2.msra.mxu0 0.0
    %637 = vmatprep.subr.mxu0 0.0
    %638 = vmatpush2.msra.mxu0 0.0
    %639 = vmatprep.subr.mxu0 0.0
    %640 = vmatpush2.msra.mxu0 0.0
    %641 = vmatprep.subr.mxu0 0.0
    %642 = vmatpush2.msra.mxu0 0.0
    %643 = vmatprep.mubr.f32.mxu0 0.0
    %644 = vmatmul.mubr.f32.gmra.mxu0 %v564
    %v645 = vpop.f32.mrf.mxu0
    %v646 = vadd.f32 0.0, %v645
    %v647 = vpop.f32.mrf.mxu0
    %648 = vmatprep.mubr.f32.mxu0 0.0
    %649 = vmatmul.mubr.f32.gmra.mxu0 %v567
    %v650 = vpop.f32.mrf.mxu0
    %v651 = vadd.f32 0.0, %v650
    %v652 = vpop.f32.mrf.mxu0
    %653 = vmatprep.mubr.f32.mxu0 0.0
    %654 = vmatmul.mubr.f32.gmra.mxu0 %v570
    %v655 = vpop.f32.mrf.mxu0
    %v656 = vadd.f32 0.0, %v655
    %v657 = vpop.f32.mrf.mxu0
    %658 = vmatprep.mubr.f32.mxu0 0.0
    %659 = vmatmul.mubr.f32.gmra.mxu0 %v573
    %v660 = vpop.f32.mrf.mxu0
    %v661 = vadd.f32 0.0, %v660
    %v662 = vpop.f32.mrf.mxu0
    %663 = vdwg.mxu0
    %v664 = vmul.f32 %v646, %v361
    %v665 = vmul.f32 %v651, %v366
    %v666 = vmul.f32 %v656, %v371
    %v667 = vmul.f32 %v661, %v376
    %v668 = vmul.f32 %v558, %v560
    %v670 = vsel %vm575, %v668, 0
    %672 = vmatprep.subr.mxu0 0.0
    %673 = vmatpush1.msra.mxu0 0.0
    %674 = vmatprep.subr.mxu0 0.0
    %675 = vmatpush1.msra.mxu0 0.0
    %676 = vmatprep.subr.mxu0 0.0
    %677 = vmatpush1.msra.mxu0 0.0
    %678 = vmatprep.subr.mxu0 0.0
    %679 = vmatpush1.msra.mxu0 0.0
    %680 = vmatprep.subr.mxu0 0.0
    %681 = vmatpush1.msra.mxu0 0.0
    %682 = vmatprep.subr.mxu0 0.0
    %683 = vmatpush1.msra.mxu0 0.0
    %684 = vmatprep.subr.mxu0 0.0
    %685 = vmatpush1.msra.mxu0 0.0
    %686 = vmatprep.subr.mxu0 0.0
    %687 = vmatpush1.msra.mxu0 0.0
    %688 = vmatprep.subr.mxu0 0.0
    %689 = vmatpush1.msra.mxu0 0.0
    %690 = vmatprep.subr.mxu0 0.0
    %691 = vmatpush1.msra.mxu0 0.0
    %692 = vmatprep.subr.mxu0 0.0
    %693 = vmatpush1.msra.mxu0 0.0
    %694 = vmatprep.subr.mxu0 0.0
    %695 = vmatpush1.msra.mxu0 0.0
    %696 = vmatprep.subr.mxu0 0.0
    %697 = vmatpush1.msra.mxu0 0.0
    %698 = vmatprep.subr.mxu0 0.0
    %699 = vmatpush1.msra.mxu0 0.0
    %700 = vmatprep.subr.mxu0 0.0
    %701 = vmatpush1.msra.mxu0 0.0
    %702 = vmatprep.subr.mxu0 0.0
    %703 = vmatpush1.msra.mxu0 %v670
    %704 = vmatprep.subr.mxu0 0.0
    %705 = vmatpush2.msra.mxu0 0.0
    %706 = vmatprep.subr.mxu0 0.0
    %707 = vmatpush2.msra.mxu0 0.0
    %708 = vmatprep.subr.mxu0 0.0
    %709 = vmatpush2.msra.mxu0 0.0
    %710 = vmatprep.subr.mxu0 0.0
    %711 = vmatpush2.msra.mxu0 0.0
    %712 = vmatprep.subr.mxu0 0.0
    %713 = vmatpush2.msra.mxu0 0.0
    %714 = vmatprep.subr.mxu0 0.0
    %715 = vmatpush2.msra.mxu0 0.0
    %716 = vmatprep.subr.mxu0 0.0
    %717 = vmatpush2.msra.mxu0 0.0
    %718 = vmatprep.subr.mxu0 0.0
    %719 = vmatpush2.msra.mxu0 0.0
    %720 = vmatprep.subr.mxu0 0.0
    %721 = vmatpush2.msra.mxu0 0.0
    %722 = vmatprep.subr.mxu0 0.0
    %723 = vmatpush2.msra.mxu0 0.0
    %724 = vmatprep.subr.mxu0 0.0
    %725 = vmatpush2.msra.mxu0 0.0
    %726 = vmatprep.subr.mxu0 0.0
    %727 = vmatpush2.msra.mxu0 0.0
    %728 = vmatprep.subr.mxu0 0.0
    %729 = vmatpush2.msra.mxu0 0.0
    %730 = vmatprep.subr.mxu0 0.0
    %731 = vmatpush2.msra.mxu0 0.0
    %732 = vmatprep.subr.mxu0 0.0
    %733 = vmatpush2.msra.mxu0 0.0
    %734 = vmatprep.subr.mxu0 0.0
    %735 = vmatpush2.msra.mxu0 0.0
    %736 = vmatprep.mubr.f32.mxu0 0.0
    %737 = vmatmul.mubr.f32.gmra.mxu0 %v564
    %v738 = vpop.f32.mrf.mxu0
    %v739 = vadd.f32 0.0, %v738
    %v740 = vpop.f32.mrf.mxu0
    %741 = vmatprep.mubr.f32.mxu0 0.0
    %742 = vmatmul.mubr.f32.gmra.mxu0 %v567
    %v743 = vpop.f32.mrf.mxu0
    %v744 = vadd.f32 0.0, %v743
    %v745 = vpop.f32.mrf.mxu0
    %746 = vmatprep.mubr.f32.mxu0 0.0
    %747 = vmatmul.mubr.f32.gmra.mxu0 %v570
    %v748 = vpop.f32.mrf.mxu0
    %v749 = vadd.f32 0.0, %v748
    %v750 = vpop.f32.mrf.mxu0
    %751 = vmatprep.mubr.f32.mxu0 0.0
    %752 = vmatmul.mubr.f32.gmra.mxu0 %v573
    %v753 = vpop.f32.mrf.mxu0
    %v754 = vadd.f32 0.0, %v753
    %v755 = vpop.f32.mrf.mxu0
    %756 = vdwg.mxu0
    %v757 = vmul.f32 %v739, %v471
    %v758 = vmul.f32 %v744, %v473
    %v759 = vmul.f32 %v749, %v475
    %v760 = vmul.f32 %v754, %v477
    %v761 = vadd.f32 %v664, %v757
    %v762 = vadd.f32 %v665, %v758
    %v763 = vadd.f32 %v666, %v759
    %v764 = vadd.f32 %v667, %v760
    %v765 = vld [vmem:[%s7] sm:$0x1]
    %v766 = vld [vmem:[#allocation2] sm:$0x1]
    %768 = vset.pattern.permute.xlu0 0
    %769 = vperm.xlu0 %768, %v766
    %v770 = vpop.permute.xlu0 %769
    %v772 = vlaneseq
    %v773 = vshrl.u32 %v772, 7
    %v774 = vsub.s32 0, %v773
    %v775 = vrot.slane %v770, %v774
    %v777 = vsel %vm388, %v765, 0
    %779 = vmatprep.subr.mxu0 0.0
    %780 = vmatpush1.msra.mxu0 0.0
    %781 = vmatprep.subr.mxu0 0.0
    %782 = vmatpush1.msra.mxu0 0.0
    %783 = vmatprep.subr.mxu0 0.0
    %784 = vmatpush1.msra.mxu0 0.0
    %785 = vmatprep.subr.mxu0 0.0
    %786 = vmatpush1.msra.mxu0 0.0
    %787 = vmatprep.subr.mxu0 0.0
    %788 = vmatpush1.msra.mxu0 0.0
    %789 = vmatprep.subr.mxu0 0.0
    %790 = vmatpush1.msra.mxu0 0.0
    %791 = vmatprep.subr.mxu0 0.0
    %792 = vmatpush1.msra.mxu0 0.0
    %793 = vmatprep.subr.mxu0 0.0
    %794 = vmatpush1.msra.mxu0 0.0
    %795 = vmatprep.subr.mxu0 0.0
    %796 = vmatpush1.msra.mxu0 0.0
    %797 = vmatprep.subr.mxu0 0.0
    %798 = vmatpush1.msra.mxu0 0.0
    %799 = vmatprep.subr.mxu0 0.0
    %800 = vmatpush1.msra.mxu0 0.0
    %801 = vmatprep.subr.mxu0 0.0
    %802 = vmatpush1.msra.mxu0 0.0
    %803 = vmatprep.subr.mxu0 0.0
    %804 = vmatpush1.msra.mxu0 %v764
    %805 = vmatprep.subr.mxu0 0.0
    %806 = vmatpush1.msra.mxu0 %v763
    %807 = vmatprep.subr.mxu0 0.0
    %808 = vmatpush1.msra.mxu0 %v762
    %809 = vmatprep.subr.mxu0 0.0
    %810 = vmatpush1.msra.mxu0 %v761
    %811 = vmatprep.subr.mxu0 0.0
    %812 = vmatpush2.msra.mxu0 0.0
    %813 = vmatprep.subr.mxu0 0.0
    %814 = vmatpush2.msra.mxu0 0.0
    %815 = vmatprep.subr.mxu0 0.0
    %816 = vmatpush2.msra.mxu0 0.0
    %817 = vmatprep.subr.mxu0 0.0
    %818 = vmatpush2.msra.mxu0 0.0
    %819 = vmatprep.subr.mxu0 0.0
    %820 = vmatpush2.msra.mxu0 0.0
    %821 = vmatprep.subr.mxu0 0.0
    %822 = vmatpush2.msra.mxu0 0.0
    %823 = vmatprep.subr.mxu0 0.0
    %824 = vmatpush2.msra.mxu0 0.0
    %825 = vmatprep.subr.mxu0 0.0
    %826 = vmatpush2.msra.mxu0 0.0
    %827 = vmatprep.subr.mxu0 0.0
    %828 = vmatpush2.msra.mxu0 0.0
    %829 = vmatprep.subr.mxu0 0.0
    %830 = vmatpush2.msra.mxu0 0.0
    %831 = vmatprep.subr.mxu0 0.0
    %832 = vmatpush2.msra.mxu0 0.0
    %833 = vmatprep.subr.mxu0 0.0
    %834 = vmatpush2.msra.mxu0 0.0
    %835 = vmatprep.subr.mxu0 0.0
    %836 = vmatpush2.msra.mxu0 0.0
    %837 = vmatprep.subr.mxu0 0.0
    %838 = vmatpush2.msra.mxu0 0.0
    %839 = vmatprep.subr.mxu0 0.0
    %840 = vmatpush2.msra.mxu0 0.0
    %841 = vmatprep.subr.mxu0 0.0
    %842 = vmatpush2.msra.mxu0 0.0
    %843 = vmatprep.mubr.f32.mxu0 0.0
    %844 = vmatmul.mubr.f32.gmra.mxu0 %v777
    %v845 = vpop.f32.mrf.mxu0
    %v846 = vadd.f32 %v775, %v845
    %v847 = vpop.f32.mrf.mxu0
    %848 = vdwg.mxu0
    %849 = vst [vmem:[#allocation3] sm:$0x1] %v846
    // Predicated region
    $region38: #{tpu_custom_call.1} parent=1 // pred_check
      _
    $region39: #{tpu_custom_call.1} parent=1 // pred_check_branch
      %851 = sbr.rel (0) target = $region41
    $region40: #{tpu_custom_call.1} parent=1 // pred_region
      %s853 = ssub.s32 16, 16
      %854 = vsyncadd [#allocation4], %s853
      %s856 = sshll.u32 [#allocation3], 4
      %s857 = int_to_ptr.vmem [resolvable:$true] %s856
      %859 = dma.vmem_to_hbm [thread:$0]  %s857, 16, %s9, [#allocation4]
    $region41: #{tpu_custom_call.1} parent=1 // pred_fallthru
      _
    // Predicated region
    $region42: #{tpu_custom_call.1} parent=1 // pred_check
      _
    $region43: #{tpu_custom_call.1} parent=1 // pred_check_branch
      %861 = sbr.rel (0) target = $region45
    $region44: #{tpu_custom_call.1} parent=1 // pred_region
      %862 = dma.done [#allocation4], 16
    $region45: #{tpu_custom_call.1} parent=1 // pred_fallthru
      _
    %863 = vsyncpa [#allocation4], 1

</llo_original>
